<compile_context>
chip_gen: v7x
topology: tpu7x:2x2x1
jax: 0.10.0
libtpu: 0.0.40
codegen_flags: <defaults>
</compile_context>

<pallas_src>
import jax
import jax.numpy as jnp
from jax.experimental import pallas as pl
from jax.experimental.pallas import tpu as pltpu


def _round_up(x, m):
    return ((x + m - 1) // m) * m


def ffn_kernel(x_ref, w1_ref, b1_ref, w2_ref, b2_ref, o_ref):
    # x_ref : (tm, H) activations in their native dtype.
    # w1_ref/w2_ref : (H, H) resident, pre-transposed (x @ W^T == x @ wT),
    #                 usually bf16 (f32 accumulation on the MXU).
    # b1_ref/b2_ref : (1, H) f32.
    x = x_ref[...]
    xf = x.astype(jnp.float32)                                 # residual in f32
    h = jnp.dot(x.astype(w1_ref.dtype), w1_ref[...],
                preferred_element_type=jnp.float32) + b1_ref[...]
    h = jnp.maximum(h, 0.0)                                    # ReLU in f32
    y = jnp.dot(h.astype(w2_ref.dtype), w2_ref[...],
                preferred_element_type=jnp.float32) + b2_ref[...]
    o_ref[...] = (y + xf).astype(o_ref.dtype)


def _vmem_cap_bytes():
    """~70% of physical VMEM (per-chip), with a v7x-safe fallback."""
    try:
        cap = int(pltpu.get_tpu_info().vmem_capacity_bytes)
    except Exception:
        cap = 64 << 20            # conservative: v7x physical VMEM per TC
    return max(int(cap * 0.7), 32 << 20)


def _vmem_estimate(tm, H, x_itemsize, w_itemsize, weight_bufs):
    """Rough VMEM footprint for one grid step (VMEM-padded shapes)."""
    Hl = _round_up(H, 128)                 # lane padding inside VMEM
    tms = _round_up(max(int(tm), 8), 8)    # sublane padding
    weights = weight_bufs * 2 * Hl * Hl * w_itemsize     # W1^T + W2^T
    biases = weight_bufs * 2 * 8 * Hl * 4                # (1,H) f32, padded
    io = 2 * tms * Hl * (2 * x_itemsize)                 # x + out, double-buf
    temps = 4 * tms * Hl * 4                             # f32 h/y + casts
    return weights + biases + io + temps


def pointwise_ffn(x, w1, b1, w2, b2, *, tile_m=2048, compute_dtype=jnp.bfloat16):
    """x: (N, L, H). w1, w2: (H, H) (PyTorch Conv1d weight squeezed),
    b1, b2: (H,). Returns (N, L, H) in x.dtype."""
    N, L, H = x.shape
    M = N * L
    x2d = x.reshape(M, H)                      # free view; native dtype kept

    x_itemsize = jnp.dtype(x.dtype).itemsize
    w_itemsize = jnp.dtype(compute_dtype).itemsize

    # ---- token-tile (M) selection -------------------------------------
    tile_m = max(8, (int(tile_m) // 8) * 8)
    if M <= 8:
        tm = M                                         # single full block
    elif M <= tile_m:
        # One tile covers everything; split into two grid steps when there is
        # enough work so v7x's two TensorCores both get a share (megacore).
        tm = _round_up(pl.cdiv(M, 2), 8) if M >= 1024 else M
    else:
        tm = tile_m

    vmem_cap = _vmem_cap_bytes()
    single_buf_w = _round_up(H, 128) >= 1024            # weights big enough to matter
    weight_bufs = 1 if single_buf_w else 2

    # Shrink the tile (keep double-buffered pipelining intact) rather than
    # clamping vmem_limit_bytes below the real block footprint.
    while tm > 8 and _vmem_estimate(tm, H, x_itemsize, w_itemsize,
                                    weight_bufs) > vmem_cap:
        tm = max(8, _round_up(tm // 2, 8))

    grid_m = pl.cdiv(M, tm)                              # partial last block OK

    # ---- parameters (weight-only traffic; activations untouched) -------
    w1t = w1.T.astype(compute_dtype)                     # (H_in, H_out)
    w2t = w2.T.astype(compute_dtype)
    b1p = b1.astype(jnp.float32).reshape(1, H)
    b2p = b2.astype(jnp.float32).reshape(1, H)

    def _const_spec(shape):
        # Resident blocks (constant index_map): single-buffer when large.
        if single_buf_w:
            return pl.BlockSpec(shape, lambda i: (0, 0),
                                pipeline_mode=pl.Buffered(1))
        return pl.BlockSpec(shape, lambda i: (0, 0))

    flops = 4 * M * H * H                                # two (M,H)x(H,H) matmuls
    bytes_accessed = (2 * M * H * x_itemsize             # x in + out
                      + 2 * H * H * w_itemsize           # weights
                      + 2 * H * 4)                       # biases

    out2d = pl.pallas_call(
        ffn_kernel,
        out_shape=jax.ShapeDtypeStruct((M, H), x.dtype),
        grid=(grid_m,),
        in_specs=[
            pl.BlockSpec((tm, H), lambda i: (i, 0)),     # x tile
            _const_spec((H, H)),                         # W1^T (resident)
            _const_spec((1, H)),                         # b1
            _const_spec((H, H)),                         # W2^T (resident)
            _const_spec((1, H)),                         # b2
        ],
        out_specs=pl.BlockSpec((tm, H), lambda i: (i, 0)),
        compiler_params=pltpu.CompilerParams(
            dimension_semantics=("parallel",),
            vmem_limit_bytes=vmem_cap,
        ),
        cost_estimate=pl.CostEstimate(
            flops=flops, transcendentals=0, bytes_accessed=bytes_accessed),
    )(x2d, w1t, b1p, w2t, b2p)

    return out2d.reshape(N, L, H)


def reference_ffn(x, w1, b1, w2, b2):
    h = jnp.maximum(jnp.einsum("nlh,oh->nlo", x, w1) + b1, 0.0)
    y = jnp.einsum("nlh,oh->nlo", h, w2) + b2
    return y + x


if __name__ == "__main__":
    # Small shapes: batch=2, seq=8, hidden=32  (N*L = 16 tokens)
    N, L, H = 2, 8, 32
    key = jax.random.PRNGKey(0)
    kx, k1, k2, k3, k4 = jax.random.split(key, 5)

    x = jax.random.normal(kx, (N, L, H), dtype=jnp.float32)

    # Parameter shapes match torch.nn.Conv1d(H, H, 1): weight (H, H, 1)
    # squeezed to (H, H), bias (H,).
    bound = 1.0 / (H ** 0.5)
    w1 = jax.random.uniform(k1, (H, H), jnp.float32, -bound, bound)
    b1 = jax.random.uniform(k2, (H,), jnp.float32, -bound, bound)
    w2 = jax.random.uniform(k3, (H, H), jnp.float32, -bound, bound)
    b2 = jax.random.uniform(k4, (H,), jnp.float32, -bound, bound)

    ref = reference_ffn(x, w1, b1, w2, b2)

    ffn = jax.jit(pointwise_ffn, static_argnames=("tile_m", "compute_dtype"))

    # bf16-weight fast path (f32 accumulation) -> bf16-level tolerance.
    out_bf16 = jax.block_until_ready(ffn(x, w1, b1, w2, b2))
    assert out_bf16.shape == (N, L, H)
    assert out_bf16.dtype == x.dtype
    assert jnp.allclose(out_bf16, ref, atol=5e-2, rtol=5e-2), "bf16 path mismatch"

    # f32 path for exact parity with the reference semantics.
    out_f32 = jax.block_until_ready(
        ffn(x, w1, b1, w2, b2, compute_dtype=jnp.float32))
    assert jnp.allclose(out_f32, ref, atol=1e-5, rtol=1e-5), "f32 path mismatch"

    print("KERNEL_OK")
</pallas_src>

<mosaic_0001>
module attributes {stable_mosaic.version = 11 : i64} {
  func.func @ffn_kernel(%arg0: i32, %arg1: memref<16x32xf32, #tpu.memory_space<vmem>>, %arg2: memref<32x32xbf16, #tpu.memory_space<vmem>>, %arg3: memref<1x32xf32, #tpu.memory_space<vmem>>, %arg4: memref<32x32xbf16, #tpu.memory_space<vmem>>, %arg5: memref<1x32xf32, #tpu.memory_space<vmem>>, %arg6: memref<16x32xf32, #tpu.memory_space<vmem>>) attributes {dimension_semantics = [#tpu.dimension_semantics<parallel>], iteration_bounds = array<i64: 1>, scalar_prefetch = 0 : i64, scratch_operands = 0 : i64, tpu.core_type = #tpu.core_type<tc>, window_params = [{transform_indices = @transform_0, window_bounds = array<i64: 16, 32>}, {pipeline_mode = #tpu.pipeline_mode<synchronous>, transform_indices = @transform_1, window_bounds = array<i64: 32, 32>}, {pipeline_mode = #tpu.pipeline_mode<synchronous>, transform_indices = @transform_2, window_bounds = array<i64: 1, 32>}, {pipeline_mode = #tpu.pipeline_mode<synchronous>, transform_indices = @transform_3, window_bounds = array<i64: 32, 32>}, {pipeline_mode = #tpu.pipeline_mode<synchronous>, transform_indices = @transform_4, window_bounds = array<i64: 1, 32>}, {transform_indices = @transform_5, window_bounds = array<i64: 16, 32>}]} {
    %c0 = arith.constant 0 : index
    %c0_0 = arith.constant 0 : index
    %0 = vector.load %arg1[%c0, %c0_0] : memref<16x32xf32, #tpu.memory_space<vmem>>, vector<16x32xf32>
    %1 = arith.truncf %0 : vector<16x32xf32> to vector<16x32xbf16>
    %c0_1 = arith.constant 0 : index
    %c0_2 = arith.constant 0 : index
    %2 = vector.load %arg2[%c0_1, %c0_2] : memref<32x32xbf16, #tpu.memory_space<vmem>>, vector<32x32xbf16>
    %cst = arith.constant dense<0.000000e+00> : vector<16x32xf32>
    %3 = tpu.matmul %1, %2, %cst {dimension_numbers = #tpu.dot_dimension_numbers<[1], [0], [0], [1], [0, 0, 1, 1], [], []>} : vector<16x32xbf16>, vector<32x32xbf16>, vector<16x32xf32> -> vector<16x32xf32>
    %c0_3 = arith.constant 0 : index
    %c0_4 = arith.constant 0 : index
    %4 = vector.load %arg3[%c0_3, %c0_4] : memref<1x32xf32, #tpu.memory_space<vmem>>, vector<1x32xf32>
    %5 = vector.broadcast %4 : vector<1x32xf32> to vector<16x32xf32>
    %6 = arith.addf %3, %5 : vector<16x32xf32>
    %cst_5 = arith.constant 0.000000e+00 : f32
    %7 = vector.broadcast %cst_5 : f32 to vector<16x32xf32>
    %8 = arith.maximumf %6, %7 : vector<16x32xf32>
    %9 = arith.truncf %8 : vector<16x32xf32> to vector<16x32xbf16>
    %c0_6 = arith.constant 0 : index
    %c0_7 = arith.constant 0 : index
    %10 = vector.load %arg4[%c0_6, %c0_7] : memref<32x32xbf16, #tpu.memory_space<vmem>>, vector<32x32xbf16>
    %cst_8 = arith.constant dense<0.000000e+00> : vector<16x32xf32>
    %11 = tpu.matmul %9, %10, %cst_8 {dimension_numbers = #tpu.dot_dimension_numbers<[1], [0], [0], [1], [0, 0, 1, 1], [], []>} : vector<16x32xbf16>, vector<32x32xbf16>, vector<16x32xf32> -> vector<16x32xf32>
    %c0_9 = arith.constant 0 : index
    %c0_10 = arith.constant 0 : index
    %12 = vector.load %arg5[%c0_9, %c0_10] : memref<1x32xf32, #tpu.memory_space<vmem>>, vector<1x32xf32>
    %13 = vector.broadcast %12 : vector<1x32xf32> to vector<16x32xf32>
    %14 = arith.addf %11, %13 : vector<16x32xf32>
    %15 = arith.addf %14, %0 : vector<16x32xf32>
    %c0_11 = arith.constant 0 : index
    %c0_12 = arith.constant 0 : index
    %16 = vector.load %arg6[%c0_11, %c0_12] : memref<16x32xf32, #tpu.memory_space<vmem>>, vector<16x32xf32>
    tpu.vector_store %arg6[%c0_11, %c0_12], %15 {strides = array<i32>} : memref<16x32xf32, #tpu.memory_space<vmem>>, vector<16x32xf32>,
    return
  }
  func.func @transform_0(%arg0: i32) -> (i32, i32) {
    %c0_i32 = arith.constant 0 : i32
    %c0_i32_0 = arith.constant 0 : i32
    return %arg0, %c0_i32 : i32, i32
  }
  func.func @transform_1(%arg0: i32) -> (i32, i32) {
    %c0_i32 = arith.constant 0 : i32
    %c0_i32_0 = arith.constant 0 : i32
    %c0_i32_1 = arith.constant 0 : i32
    return %c0_i32, %c0_i32_0 : i32, i32
  }
  func.func @transform_2(%arg0: i32) -> (i32, i32) {
    %c0_i32 = arith.constant 0 : i32
    %c0_i32_0 = arith.constant 0 : i32
    %c0_i32_1 = arith.constant 0 : i32
    return %c0_i32, %c0_i32_0 : i32, i32
  }
  func.func @transform_3(%arg0: i32) -> (i32, i32) {
    %c0_i32 = arith.constant 0 : i32
    %c0_i32_0 = arith.constant 0 : i32
    %c0_i32_1 = arith.constant 0 : i32
    return %c0_i32, %c0_i32_0 : i32, i32
  }
  func.func @transform_4(%arg0: i32) -> (i32, i32) {
    %c0_i32 = arith.constant 0 : i32
    %c0_i32_0 = arith.constant 0 : i32
    %c0_i32_1 = arith.constant 0 : i32
    return %c0_i32, %c0_i32_0 : i32, i32
  }
  func.func @transform_5(%arg0: i32) -> (i32, i32) {
    %c0_i32 = arith.constant 0 : i32
    %c0_i32_0 = arith.constant 0 : i32
    return %arg0, %c0_i32 : i32, i32
  }
}

</mosaic_0001>

<llo_original>
// kernel: pointwise_ffn.1
$region0: #{pointwise_ffn.1}
  #allocation0 [shape = 'u32[]', space=smem, size = 0x4, offset = 0x4, fixed_abs, tag = 'smem constant byte address 0x4 - core index']
  #allocation1 [shape = 'u32[144,128]{1,0:T(1,128)}', space=vmem, size = 0x12000, scoped, tag = 'internal scratch']
  %s0 = inlined_call_operand.vmem [shape: f32[16,32], index: 0, kind: input, shape index: {}]
  %s1 = inlined_call_operand.vmem [shape: bf16[32,32], index: 1, kind: input, shape index: {}]
  %s2 = inlined_call_operand.vmem [shape: f32[1,32], index: 2, kind: input, shape index: {}]
  %s3 = inlined_call_operand.vmem [shape: bf16[32,32], index: 3, kind: input, shape index: {}]
  %s4 = inlined_call_operand.vmem [shape: f32[1,32], index: 4, kind: input, shape index: {}]
  %s5 = inlined_call_operand.hbm [shape: f32[16,32], index: 5, kind: output, shape index: {}]
  %s6 = sld [smem:[#allocation0]]
  $region30: #{pointwise_ffn.1} parent=0
    _
  %s8 = ssub.s32 1, %s6
  %s9 = scalar_select 0, %s8, %s6
  $region1: #{pointwise_ffn.1} parent=0
    #allocation2 [shape = 'u8[8192]{0}', space=vmem, size = 0x2000, scoped, tag = 'output window, operand 0, single buffered']
    #allocation3 [shape = 's32[1]{0}', space=sflag, size = 0x4, scoped, tag = 'scoped memory for pointwise_ffn.1']
    %10 = vsyncpa [#allocation3], 0
    // Predicated region
    $region2: #{pointwise_ffn.1} parent=1 // pred_check
      _
    $region3: #{pointwise_ffn.1} parent=1 // pred_check_branch
      %12 = sbr.rel (0) target = $region5
    $region4: #{pointwise_ffn.1} parent=1 // pred_region
      _
    $region5: #{pointwise_ffn.1} parent=1 // pred_fallthru
      _
    // Predicated region
    $region6: #{pointwise_ffn.1} parent=1 // pred_check
      _
    $region7: #{pointwise_ffn.1} parent=1 // pred_check_branch
      %14 = sbr.rel (0) target = $region9
    $region8: #{pointwise_ffn.1} parent=1 // pred_region
      _
    $region9: #{pointwise_ffn.1} parent=1 // pred_fallthru
      _
    // Predicated region
    $region10: #{pointwise_ffn.1} parent=1 // pred_check
      _
    $region11: #{pointwise_ffn.1} parent=1 // pred_check_branch
      %16 = sbr.rel (0) target = $region13
    $region12: #{pointwise_ffn.1} parent=1 // pred_region
      _
    $region13: #{pointwise_ffn.1} parent=1 // pred_fallthru
      _
    // Predicated region
    $region14: #{pointwise_ffn.1} parent=1 // pred_check
      _
    $region15: #{pointwise_ffn.1} parent=1 // pred_check_branch
      %18 = sbr.rel (0) target = $region17
    $region16: #{pointwise_ffn.1} parent=1 // pred_region
      _
    $region17: #{pointwise_ffn.1} parent=1 // pred_fallthru
      _
    // Predicated region
    $region18: #{pointwise_ffn.1} parent=1 // pred_check
      _
    $region19: #{pointwise_ffn.1} parent=1 // pred_check_branch
      %20 = sbr.rel (0) target = $region21
    $region20: #{pointwise_ffn.1} parent=1 // pred_region
      _
    $region21: #{pointwise_ffn.1} parent=1 // pred_fallthru
      _
    %v22 = vld [vmem:[%s0] sm:$0xff]
    %v23 = vld [vmem:[%s0 + $0x8] sm:$0xff]
    %v24 = vpack.c.bf16 %v23, %v22
    %v25 = vld [vmem:[%s1] sm:$0xf]
    %v26 = vld [vmem:[%s1 + $0x4] sm:$0xf]
    %v27 = vld [vmem:[%s1 + $0x8] sm:$0xf]
    %v28 = vld [vmem:[%s1 + $0xc] sm:$0xf]
    %v29 = vld [vmem:[%s2] sm:$0x1]
    %v31 = vlaneseq
    %v32 = vshrl.u32 %v31, 7
    %v33 = vsub.s32 0, %v32
    %v34 = vrot.slane %v29, %v33
    %v40 = vunpack.c.l.b16 %v25
    %v41 = vunpack.c.l.b16 %v26
    %v42 = vunpack.c.l.b16 %v27
    %v43 = vunpack.c.l.b16 %v28
    %v44 = vpack.c.b16 %v41, %v40
    %v45 = vpack.c.b16 %v43, %v42
    %vm48 = vcmask 261120
    %v50 = vsel %vm48, %v24, 0
    %52 = vmatprep.subr.bf16.mxu0 0
    %53 = vmatpush1.bf16.msra.mxu0 %v44
    %54 = vmatprep.subr.bf16.mxu0 0
    %55 = vmatpush1.bf16.msra.mxu0 %v45
    %56 = vmatprep.subr.bf16.mxu0 0
    %57 = vmatpush1.bf16.msra.mxu0 0
    %58 = vmatprep.subr.bf16.mxu0 0
    %59 = vmatpush1.bf16.msra.mxu0 0
    %60 = vmatprep.subr.bf16.mxu0 0
    %61 = vmatpush1.bf16.msra.mxu0 0
    %62 = vmatprep.subr.bf16.mxu0 0
    %63 = vmatpush1.bf16.msra.mxu0 0
    %64 = vmatprep.subr.bf16.mxu0 0
    %65 = vmatpush1.bf16.msra.mxu0 0
    %66 = vmatprep.subr.bf16.mxu0 0
    %67 = vmatpush1.bf16.msra.mxu0 0
    %68 = vmatprep.subr.bf16.mxu0 0
    %69 = vmatpush1.bf16.msra.mxu0 0
    %70 = vmatprep.subr.bf16.mxu0 0
    %71 = vmatpush1.bf16.msra.mxu0 0
    %72 = vmatprep.subr.bf16.mxu0 0
    %73 = vmatpush1.bf16.msra.mxu0 0
    %74 = vmatprep.subr.bf16.mxu0 0
    %75 = vmatpush1.bf16.msra.mxu0 0
    %76 = vmatprep.subr.bf16.mxu0 0
    %77 = vmatpush1.bf16.msra.mxu0 0
    %78 = vmatprep.subr.bf16.mxu0 0
    %79 = vmatpush1.bf16.msra.mxu0 0
    %80 = vmatprep.subr.bf16.mxu0 0
    %81 = vmatpush1.bf16.msra.mxu0 0
    %82 = vmatprep.subr.bf16.mxu0 0
    %83 = vmatpush1.bf16.msra.mxu0 0
    %84 = vmatprep.mubr.bf16.mxu0 0
    %85 = vmatmul.mubr.bf16.gmra.mrb[0].mxu0 %v50
    %v86 = vpop.f32.mrb[0].mxu0
    %v87 = vadd.f32 %v34, %v86
    %v88 = vpop.f32.mrb[0].mxu0
    %v89 = vpop.f32.mrb[0].mxu0
    %v90 = vadd.f32 %v34, %v89
    %v91 = vpop.f32.mrb[0].mxu0
    %92 = vdwg.mxu0
    %v93 = vmax.f32 %v87, 0.0
    %v94 = vmax.f32 %v90, 0.0
    %v95 = vpack.c.bf16 %v94, %v93
    %v96 = vld [vmem:[%s3] sm:$0xf]
    %v97 = vld [vmem:[%s3 + $0x4] sm:$0xf]
    %v98 = vld [vmem:[%s3 + $0x8] sm:$0xf]
    %v99 = vld [vmem:[%s3 + $0xc] sm:$0xf]
    %v100 = vld [vmem:[%s4] sm:$0x1]
    %v102 = vlaneseq
    %v103 = vshrl.u32 %v102, 7
    %v104 = vsub.s32 0, %v103
    %v105 = vrot.slane %v100, %v104
    %v111 = vunpack.c.l.b16 %v96
    %v112 = vunpack.c.l.b16 %v97
    %v113 = vunpack.c.l.b16 %v98
    %v114 = vunpack.c.l.b16 %v99
    %v115 = vpack.c.b16 %v112, %v111
    %v116 = vpack.c.b16 %v114, %v113
    %v120 = vsel %vm48, %v95, 0
    %122 = vmatprep.subr.bf16.mxu0 0
    %123 = vmatpush1.bf16.msra.mxu0 %v115
    %124 = vmatprep.subr.bf16.mxu0 0
    %125 = vmatpush1.bf16.msra.mxu0 %v116
    %126 = vmatprep.subr.bf16.mxu0 0
    %127 = vmatpush1.bf16.msra.mxu0 0
    %128 = vmatprep.subr.bf16.mxu0 0
    %129 = vmatpush1.bf16.msra.mxu0 0
    %130 = vmatprep.subr.bf16.mxu0 0
    %131 = vmatpush1.bf16.msra.mxu0 0
    %132 = vmatprep.subr.bf16.mxu0 0
    %133 = vmatpush1.bf16.msra.mxu0 0
    %134 = vmatprep.subr.bf16.mxu0 0
    %135 = vmatpush1.bf16.msra.mxu0 0
    %136 = vmatprep.subr.bf16.mxu0 0
    %137 = vmatpush1.bf16.msra.mxu0 0
    %138 = vmatprep.subr.bf16.mxu0 0
    %139 = vmatpush1.bf16.msra.mxu0 0
    %140 = vmatprep.subr.bf16.mxu0 0
    %141 = vmatpush1.bf16.msra.mxu0 0
    %142 = vmatprep.subr.bf16.mxu0 0
    %143 = vmatpush1.bf16.msra.mxu0 0
    %144 = vmatprep.subr.bf16.mxu0 0
    %145 = vmatpush1.bf16.msra.mxu0 0
    %146 = vmatprep.subr.bf16.mxu0 0
    %147 = vmatpush1.bf16.msra.mxu0 0
    %148 = vmatprep.subr.bf16.mxu0 0
    %149 = vmatpush1.bf16.msra.mxu0 0
    %150 = vmatprep.subr.bf16.mxu0 0
    %151 = vmatpush1.bf16.msra.mxu0 0
    %152 = vmatprep.subr.bf16.mxu0 0
    %153 = vmatpush1.bf16.msra.mxu0 0
    %154 = vmatprep.mubr.bf16.mxu0 0
    %155 = vmatmul.mubr.bf16.gmra.mrb[0].mxu0 %v120
    %v156 = vpop.f32.mrb[0].mxu0
    %v157 = vadd.f32 %v105, %v156
    %v158 = vpop.f32.mrb[0].mxu0
    %v159 = vpop.f32.mrb[0].mxu0
    %v160 = vadd.f32 %v105, %v159
    %v161 = vpop.f32.mrb[0].mxu0
    %162 = vdwg.mxu0
    %v163 = vadd.f32 %v157, %v22
    %v164 = vadd.f32 %v160, %v23
    %165 = vst.msk [vmem:[#allocation2] sm:$0xff] %vm48, %v163
    %166 = vst.msk [vmem:[#allocation2 + $0x8] sm:$0xff] %vm48, %v164
    // Predicated region
    $region22: #{pointwise_ffn.1} parent=1 // pred_check
      _
    $region23: #{pointwise_ffn.1} parent=1 // pred_check_branch
      %168 = sbr.rel (0) target = $region25
    $region24: #{pointwise_ffn.1} parent=1 // pred_region
      %s170 = ssub.s32 256, 256
      %171 = vsyncadd [#allocation3], %s170
      %s172 = sshll.u32 [#allocation2], 4
      %s173 = int_to_ptr.vmem [resolvable:$true] %s172
      %178 = dma.vmem_to_hbm [thread:$0]  %s173, 256, %s5, [#allocation3], 128, 128, 8
    $region25: #{pointwise_ffn.1} parent=1 // pred_fallthru
      _
    // Predicated region
    $region26: #{pointwise_ffn.1} parent=1 // pred_check
      _
    $region27: #{pointwise_ffn.1} parent=1 // pred_check_branch
      %180 = sbr.rel (0) target = $region29
    $region28: #{pointwise_ffn.1} parent=1 // pred_region
      %181 = dma.done [#allocation3], 256
    $region29: #{pointwise_ffn.1} parent=1 // pred_fallthru
      _
    %182 = vsyncpa [#allocation3], 1

</llo_original>
